<compile_context>
chip_gen: v5e
topology: v5e:2x2
jax: 0.10.0
libtpu: 0.0.40
codegen_flags: <defaults>
</compile_context>

<pallas_src>
import functools

import jax
import jax.numpy as jnp
from jax import lax
from jax.experimental import pallas as pl
from jax.experimental.pallas import tpu as pltpu

_LANE = 128
_SUBLANE = 8
_STRIP = 8  # rows per merge strip (one f32 sublane group)


def _round_up(x, m):
    return (x + m - 1) // m * m


def _vmem_limit(est_bytes):
    """Generation-aware VMEM limit: honest estimate + headroom, capped below capacity."""
    cap = 64 * 1024 * 1024  # conservative fallback (v7x physical)
    try:
        info = pltpu.get_tpu_info()
        cap = int(getattr(info, "vmem_capacity_bytes", cap))
    except Exception:
        pass
    limit = max(int(1.5 * est_bytes), 32 * 1024 * 1024)
    return int(min(limit, max(cap - 16 * 1024 * 1024, 16 * 1024 * 1024)))


# -----------------------------------------------------------------------------
# Kernel 1: synthetic linear "model" forward + F.normalize(p=2, dim=1, eps=1e-12).
# grid = (query tiles ["parallel"], K tiles ["arbitrary"]); the C*H*W contraction
# is streamed so huge image tiles are never held (or double-buffered) in VMEM.
# -----------------------------------------------------------------------------
def _embed_kernel(imgs_ref, w_ref, qf_ref, acc_ref):
    ki = pl.program_id(1)

    @pl.when(ki == 0)
    def _init():
        acc_ref[...] = jnp.zeros_like(acc_ref)

    acc_ref[...] += jnp.dot(imgs_ref[...], w_ref[...],
                            preferred_element_type=jnp.float32)

    @pl.when(ki == pl.num_programs(1) - 1)
    def _finish():
        feats = acc_ref[...]
        sumsq = jnp.sum(feats * feats, axis=-1, keepdims=True)
        inv_norm = lax.rsqrt(jnp.maximum(sumsq, jnp.float32(1e-24)))  # == x / max(||x||, 1e-12)
        qf_ref[...] = (feats * inv_norm).astype(qf_ref.dtype)


# -----------------------------------------------------------------------------
# Kernel 2: similarity + same-cam masking + streaming top-k.
# grid = (query tiles ["parallel"], gallery tiles ["arbitrary"]).
# The running top-k lives in lane-dense (q_tile, 128) output slabs (accumulator
# pattern); merging is done strip-by-strip (8 query rows at a time) so the live
# candidate arrays stay well under 64 vregs.
# -----------------------------------------------------------------------------
def _sim_topk_kernel(topk, ng_real, ng_tile,
                     qf_ref, qkey_ref, gT_ref, gkey_ref,
                     vals_ref, idx_ref):
    gi = pl.program_id(1)

    @pl.when(gi == 0)
    def _init():
        vals_ref[...] = jnp.full(vals_ref.shape, -jnp.inf, dtype=vals_ref.dtype)
        idx_ref[...] = jnp.full(idx_ref.shape, -1, dtype=idx_ref.dtype)

    # Per-gallery-tile invariants, hoisted out of the strip loop.
    col8 = gi * ng_tile + lax.broadcasted_iota(jnp.int32, (_STRIP, ng_tile), 1)
    out_lane = lax.broadcasted_iota(jnp.int32, (_STRIP, _LANE), 1)
    big = jnp.int32(2 ** 31 - 1)
    n_strips = vals_ref.shape[0] // _STRIP

    def strip_body(s, carry):
        r0 = pl.multiple_of(s * _STRIP, _STRIP)
        rows = pl.ds(r0, _STRIP)

        # (8, D) @ (D, Tg) similarity strip: bf16 MXU operands, f32 accumulation.
        sim = jnp.dot(qf_ref[rows, :], gT_ref[...],
                      preferred_element_type=jnp.float32)

        # rm_same_cam: fused (pid, camid) key -> one compare; matching entries get -1.
        same = qkey_ref[rows, :] == gkey_ref[...]
        sim = jnp.where(same, jnp.float32(-1.0), sim)
        # Padded gallery columns (zero feature columns would give sim = 0) -> -inf.
        sim = jnp.where(col8 < ng_real, sim, -jnp.inf)

        # Candidate row = [running top-k slab | this gallery tile], built in-registers.
        cand_vals = jnp.concatenate([vals_ref[rows, :], sim], axis=-1)
        cand_idx = jnp.concatenate([idx_ref[rows, :], col8], axis=-1)

        new_vals = jnp.full((_STRIP, _LANE), -jnp.inf, dtype=jnp.float32)
        new_idx = jnp.full((_STRIP, _LANE), -1, dtype=jnp.int32)
        for k in range(topk):
            mx = jnp.max(cand_vals, axis=-1, keepdims=True)
            gidx = jnp.min(jnp.where(cand_vals == mx, cand_idx, big),
                           axis=-1, keepdims=True)
            new_vals = jnp.where(out_lane == k, mx, new_vals)
            new_idx = jnp.where(out_lane == k, gidx, new_idx)
            # Gallery indices are unique among finite candidates (slab init = -1, tile
            # ranges disjoint from previously selected indices) -> single-compare knockout.
            cand_vals = jnp.where(cand_idx == gidx, -jnp.inf, cand_vals)

        # One dense (8, 128) store per output per strip.
        vals_ref[rows, :] = new_vals
        idx_ref[rows, :] = new_idx
        return carry

    lax.fori_loop(0, n_strips, strip_body, 0, unroll=False)


def matcher_forward(imgs, q_pids, q_camids, w_model,
                    g_feats_optimized, g_pids, g_camids, topk=10,
                    q_tile=128, ng_tile=1024, k_tile=2048):
    """Full Matcher.forward hot path: model matmul + normalize + sim + mask + top-k."""
    nq = imgs.shape[0]
    d, ng = g_feats_optimized.shape
    k_in = w_model.shape[0]
    assert w_model.shape[1] == d
    assert topk <= ng, "topk must not exceed the gallery size"
    assert topk <= _LANE, "topk must fit the 128-lane running slab"

    # ---- tile-size selection -------------------------------------------------
    nq8 = _round_up(nq, _SUBLANE)
    q_tile = max(_SUBLANE, _round_up(min(q_tile, nq8), _SUBLANE))
    # Give v7x's two TensorCores at least one query tile each on the "parallel" axis.
    if nq8 // q_tile < 2 and nq8 >= 2 * _SUBLANE:
        q_tile = _round_up(-(-nq8 // 2), _SUBLANE)
    nq_pad = _round_up(nq, q_tile)

    ng_tile = _round_up(max(_LANE, min(ng_tile, _round_up(ng, _LANE))), _LANE)
    ng_pad = _round_up(ng, ng_tile)

    d_pad = _round_up(d, _LANE)
    k_tile = max(_LANE, _round_up(min(k_tile, _round_up(k_in, _LANE)), _LANE))
    k_pad = _round_up(k_in, k_tile)

    # ---- operand layout / dtype plumbing (bf16 MXU operands, (8,128)-aligned) -
    imgs_flat = imgs.reshape(nq, -1).astype(jnp.bfloat16)
    imgs_flat = jnp.pad(imgs_flat, ((0, nq_pad - nq), (0, k_pad - k_in)))
    w_bf16 = jnp.pad(w_model.astype(jnp.bfloat16),
                     ((0, k_pad - k_in), (0, d_pad - d)))
    gT = jnp.pad(g_feats_optimized.astype(jnp.bfloat16),
                 ((0, d_pad - d), (0, ng_pad - ng)))

    # Fused (pid, camid) -> single int32 key; exact iff 0 <= camid < 2**15, |pid| < 2**16.
    q_pids_i = q_pids.astype(jnp.int32)
    q_camids_i = q_camids.astype(jnp.int32)
    g_pids_i = g_pids.astype(jnp.int32)
    g_camids_i = g_camids.astype(jnp.int32)
    assert int(jnp.min(g_camids_i)) >= 0 and int(jnp.max(g_camids_i)) < (1 << 15)
    assert int(jnp.min(q_camids_i)) >= 0 and int(jnp.max(q_camids_i)) < (1 << 15)
    key_shift = jnp.int32(1 << 15)
    qkey = (q_pids_i * key_shift + q_camids_i).reshape(nq, 1)
    qkey = jnp.pad(qkey, ((0, nq_pad - nq), (0, 0)))   # padded query rows are sliced off
    gkey = (g_pids_i * key_shift + g_camids_i).reshape(1, ng)
    gkey = jnp.pad(gkey, ((0, 0), (0, ng_pad - ng)))   # padded cols are -inf-masked in-kernel

    # ---- kernel 1: embed + normalize ------------------------------------------
    embed_grid = (nq_pad // q_tile, k_pad // k_tile)
    est_embed = (2 * (q_tile * k_tile * 2 + k_tile * d_pad * 2 + q_tile * d_pad * 2)
                 + q_tile * d_pad * 4)
    qf = pl.pallas_call(
        _embed_kernel,
        out_shape=jax.ShapeDtypeStruct((nq_pad, d_pad), jnp.bfloat16),
        grid_spec=pltpu.PrefetchScalarGridSpec(
            num_scalar_prefetch=0,
            grid=embed_grid,
            in_specs=[
                pl.BlockSpec((q_tile, k_tile), lambda qi, ki: (qi, ki)),  # imgs (streamed K)
                pl.BlockSpec((k_tile, d_pad), lambda qi, ki: (ki, 0)),    # model weights
            ],
            out_specs=pl.BlockSpec((q_tile, d_pad), lambda qi, ki: (qi, 0)),
            scratch_shapes=[pltpu.VMEM((q_tile, d_pad), jnp.float32)],     # f32 accumulator
        ),
        compiler_params=pltpu.CompilerParams(
            dimension_semantics=("parallel", "arbitrary"),
            vmem_limit_bytes=_vmem_limit(est_embed),
        ),
    )(imgs_flat, w_bf16)

    # ---- kernel 2: similarity + masking + streaming top-k ---------------------
    sim_grid = (nq_pad // q_tile, ng_pad // ng_tile)
    est_sim = 2 * (q_tile * d_pad * 2            # qf block
                   + q_tile * _LANE * 4          # qkey block (lane-padded)
                   + d_pad * ng_tile * 2         # gallery feats^T block
                   + _SUBLANE * ng_tile * 4      # gkey block (sublane-padded)
                   + 2 * q_tile * _LANE * 4)     # vals + idx output slabs
    vals, idx = pl.pallas_call(
        functools.partial(_sim_topk_kernel, topk, ng, ng_tile),
        out_shape=(jax.ShapeDtypeStruct((nq_pad, _LANE), jnp.float32),
                   jax.ShapeDtypeStruct((nq_pad, _LANE), jnp.int32)),
        grid_spec=pltpu.PrefetchScalarGridSpec(
            num_scalar_prefetch=0,
            grid=sim_grid,
            in_specs=[
                pl.BlockSpec((q_tile, d_pad), lambda qi, gi: (qi, 0)),   # normalized q feats
                pl.BlockSpec((q_tile, 1), lambda qi, gi: (qi, 0)),       # fused q key
                pl.BlockSpec((d_pad, ng_tile), lambda qi, gi: (0, gi)),  # gallery feats^T (streamed)
                pl.BlockSpec((1, ng_tile), lambda qi, gi: (0, gi)),      # fused g key (streamed)
            ],
            out_specs=(
                pl.BlockSpec((q_tile, _LANE), lambda qi, gi: (qi, 0)),   # top-k values slab
                pl.BlockSpec((q_tile, _LANE), lambda qi, gi: (qi, 0)),   # top-k indices slab
            ),
        ),
        compiler_params=pltpu.CompilerParams(
            dimension_semantics=("parallel", "arbitrary"),
            vmem_limit_bytes=_vmem_limit(est_sim),
        ),
    )(qf, qkey, gT, gkey)

    topk_sim = vals[:nq, :topk]
    topk_index = idx[:nq, :topk]

    # Tiny (Nq, topk) gathers/compares stay in plain JAX.
    match_pids = jnp.take(g_pids_i, topk_index, axis=0)
    match_camids = jnp.take(g_camids_i, topk_index, axis=0)
    matches = q_pids_i.reshape(-1, 1) == match_pids

    return {
        "matches": matches,
        "sims": topk_sim,
        "pids": match_pids,
        "camids": match_camids,
        "indices": topk_index,
    }


if __name__ == "__main__":
    key = jax.random.PRNGKey(0)
    k_img, k_w, k_g = jax.random.split(key, 3)

    # Small shapes consistent with the forward: NCHW query images, a linear
    # embedding model, and a precomputed gallery.
    NQ, C, H, W = 4, 4, 16, 16
    D = 32          # embedding dim
    NG = 64         # gallery size
    TOPK = 10

    imgs = jax.random.normal(k_img, (NQ, C, H, W), dtype=jnp.float32)
    w_model = jax.random.normal(k_w, (C * H * W, D), dtype=jnp.float32) * 0.02

    # Gallery setup (mirrors Matcher.__init__ precompute, done in plain JAX glue).
    g_feats = jax.random.normal(k_g, (NG, D), dtype=jnp.float32)
    g_norm = jnp.maximum(jnp.linalg.norm(g_feats, axis=1, keepdims=True), 1e-12)
    g_feats_optimized = (g_feats / g_norm).T                      # (D, NG)
    g_pids = jnp.arange(NG, dtype=jnp.int32) % 6
    g_camids = jnp.arange(NG, dtype=jnp.int32) % 3

    q_pids = jnp.array([0, 1, 2, 3], dtype=jnp.int32)
    q_camids = jnp.array([0, 1, 0, 1], dtype=jnp.int32)

    out = matcher_forward(imgs, q_pids, q_camids, w_model,
                          g_feats_optimized, g_pids, g_camids, topk=TOPK)
    jax.block_until_ready(out)

    # Shape / dtype sanity checks.
    assert out["sims"].shape == (NQ, TOPK)
    assert out["indices"].shape == (NQ, TOPK)
    assert out["pids"].shape == (NQ, TOPK)
    assert out["camids"].shape == (NQ, TOPK)
    assert out["matches"].dtype == jnp.bool_
    assert bool(jnp.all(out["indices"] >= 0)) and bool(jnp.all(out["indices"] < NG))
    assert bool(jnp.all(out["sims"][:, :-1] >= out["sims"][:, 1:]))  # sorted descending

    # Plain-JAX reference with matching bf16 operand rounding (value check only).
    imgs_bf = imgs.reshape(NQ, -1).astype(jnp.bfloat16).astype(jnp.float32)
    w_bf = w_model.astype(jnp.bfloat16).astype(jnp.float32)
    feats_ref = imgs_bf @ w_bf
    qf = feats_ref / jnp.maximum(jnp.linalg.norm(feats_ref, axis=1, keepdims=True), 1e-12)
    qf_bf = qf.astype(jnp.bfloat16).astype(jnp.float32)
    gT_bf = g_feats_optimized.astype(jnp.bfloat16).astype(jnp.float32)
    sim_ref = qf_bf @ gT_bf
    mask = (q_pids[:, None] == g_pids[None, :]) & (q_camids[:, None] == g_camids[None, :])
    sim_ref = jnp.where(mask, -1.0, sim_ref)
    ref_vals, _ = jax.lax.top_k(sim_ref, TOPK)
    assert jnp.allclose(out["sims"], ref_vals, atol=3e-2), "top-k values mismatch vs reference"

    print("KERNEL_OK")
</pallas_src>

<mosaic_0001>
module attributes {stable_mosaic.version = 11 : i64} {
  func.func @_embed_kernel(%arg0: i32, %arg1: i32, %arg2: memref<8x1024xbf16, #tpu.memory_space<vmem>>, %arg3: memref<1024x128xbf16, #tpu.memory_space<vmem>>, %arg4: memref<8x128xbf16, #tpu.memory_space<vmem>>, %arg5: memref<8x128xf32, #tpu.memory_space<vmem>>) attributes {dimension_semantics = [#tpu.dimension_semantics<parallel>, #tpu.dimension_semantics<arbitrary>], iteration_bounds = array<i64: 1, 1>, scalar_prefetch = 0 : i64, scratch_operands = 1 : i64, tpu.core_type = #tpu.core_type<tc>, window_params = [{transform_indices = @transform_0, window_bounds = array<i64: 8, 1024>}, {transform_indices = @transform_1, window_bounds = array<i64: 1024, 128>}, {transform_indices = @transform_2, window_bounds = array<i64: 8, 128>}]} {
    %c0_i32 = arith.constant 0 : i32
    %0 = arith.cmpi eq, %arg1, %c0_i32 : i32
    %1 = arith.extui %0 : i1 to i32
    %c0_i32_0 = arith.constant 0 : i32
    %2 = arith.cmpi ne, %1, %c0_i32_0 : i32
    scf.if %2 {
      %cst_10 = arith.constant 0.000000e+00 : f32
      %12 = vector.broadcast %cst_10 : f32 to vector<8x128xf32>
      %c0_11 = arith.constant 0 : index
      %c0_12 = arith.constant 0 : index
      %13 = vector.load %arg5[%c0_11, %c0_12] : memref<8x128xf32, #tpu.memory_space<vmem>>, vector<8x128xf32>
      tpu.vector_store %arg5[%c0_11, %c0_12], %12 {strides = array<i32>} : memref<8x128xf32, #tpu.memory_space<vmem>>, vector<8x128xf32>,
    } else {
    }
    %c0 = arith.constant 0 : index
    %c0_1 = arith.constant 0 : index
    %3 = vector.load %arg5[%c0, %c0_1] : memref<8x128xf32, #tpu.memory_space<vmem>>, vector<8x128xf32>
    %c0_2 = arith.constant 0 : index
    %c0_3 = arith.constant 0 : index
    %4 = vector.load %arg2[%c0_2, %c0_3] : memref<8x1024xbf16, #tpu.memory_space<vmem>>, vector<8x1024xbf16>
    %c0_4 = arith.constant 0 : index
    %c0_5 = arith.constant 0 : index
    %5 = vector.load %arg3[%c0_4, %c0_5] : memref<1024x128xbf16, #tpu.memory_space<vmem>>, vector<1024x128xbf16>
    %cst = arith.constant dense<0.000000e+00> : vector<8x128xf32>
    %6 = tpu.matmul %4, %5, %cst {dimension_numbers = #tpu.dot_dimension_numbers<[1], [0], [0], [1], [0, 0, 1, 1], [], []>} : vector<8x1024xbf16>, vector<1024x128xbf16>, vector<8x128xf32> -> vector<8x128xf32>
    %7 = arith.addf %3, %6 : vector<8x128xf32>
    %c0_6 = arith.constant 0 : index
    %c0_7 = arith.constant 0 : index
    %8 = vector.load %arg5[%c0_6, %c0_7] : memref<8x128xf32, #tpu.memory_space<vmem>>, vector<8x128xf32>
    tpu.vector_store %arg5[%c0_6, %c0_7], %7 {strides = array<i32>} : memref<8x128xf32, #tpu.memory_space<vmem>>, vector<8x128xf32>,
    %c0_i32_8 = arith.constant 0 : i32
    %9 = arith.cmpi eq, %arg1, %c0_i32_8 : i32
    %10 = arith.extui %9 : i1 to i32
    %c0_i32_9 = arith.constant 0 : i32
    %11 = arith.cmpi ne, %10, %c0_i32_9 : i32
    scf.if %11 {
      %c0_10 = arith.constant 0 : index
      %c0_11 = arith.constant 0 : index
      %12 = vector.load %arg5[%c0_10, %c0_11] : memref<8x128xf32, #tpu.memory_space<vmem>>, vector<8x128xf32>
      %13 = arith.mulf %12, %12 : vector<8x128xf32>
      %cst_12 = arith.constant dense<0.000000e+00> : vector<8xf32>
      %14 = vector.multi_reduction <add>, %13, %cst_12 [1] : vector<8x128xf32> to vector<8xf32>
      %15 = vector.shape_cast %14 : vector<8xf32> to vector<8x1xf32>
      %cst_13 = arith.constant 1.000000e-24 : f32
      %16 = vector.broadcast %cst_13 : f32 to vector<8x1xf32>
      %17 = arith.maximumf %15, %16 : vector<8x1xf32>
      %18 = math.rsqrt %17 : vector<8x1xf32>
      %19 = vector.broadcast %18 : vector<8x1xf32> to vector<8x128xf32>
      %20 = arith.mulf %12, %19 : vector<8x128xf32>
      %21 = arith.truncf %20 : vector<8x128xf32> to vector<8x128xbf16>
      %c0_14 = arith.constant 0 : index
      %c0_15 = arith.constant 0 : index
      %22 = vector.load %arg4[%c0_14, %c0_15] : memref<8x128xbf16, #tpu.memory_space<vmem>>, vector<8x128xbf16>
      tpu.vector_store %arg4[%c0_14, %c0_15], %21 {strides = array<i32>} : memref<8x128xbf16, #tpu.memory_space<vmem>>, vector<8x128xbf16>,
    } else {
    }
    return
  }
  func.func @transform_0(%arg0: i32, %arg1: i32) -> (i32, i32) {
    %c0_i32 = arith.constant 0 : i32
    return %arg0, %arg1 : i32, i32
  }
  func.func @transform_1(%arg0: i32, %arg1: i32) -> (i32, i32) {
    %c0_i32 = arith.constant 0 : i32
    %c0_i32_0 = arith.constant 0 : i32
    return %arg1, %c0_i32 : i32, i32
  }
  func.func @transform_2(%arg0: i32, %arg1: i32) -> (i32, i32) {
    %c0_i32 = arith.constant 0 : i32
    %c0_i32_0 = arith.constant 0 : i32
    return %arg0, %c0_i32 : i32, i32
  }
}

</mosaic_0001>

<llo_original>
// kernel: tpu_custom_call.1
$region0: #{tpu_custom_call.1}
  #allocation0 [shape = 'u32[]', space=smem, size = 0x4, offset = 0x4, fixed_abs, tag = 'smem constant byte address 0x4 - core index']
  #allocation1 [shape = 'u32[72,128]{1,0:T(1,128)}', space=vmem, size = 0x9000, scoped, tag = 'internal scratch']
  #allocation2 [shape = 'f32[8,128]{1,0:T(8,128)}', space=vmem, size = 0x1000, scoped, tag = 'scratch operand']
  %s0 = inlined_call_operand.hbm [shape: bf16[8,1024], index: 0, kind: input, shape index: {}]
  %s1 = inlined_call_operand.hbm [shape: bf16[1024,128], index: 1, kind: input, shape index: {}]
  %s2 = inlined_call_operand.hbm [shape: bf16[8,128], index: 2, kind: output, shape index: {}]
  %s3 = sld [smem:[#allocation0]]
  $region34: #{tpu_custom_call.1} parent=0
    _
  %s5 = ssub.s32 1, %s3
  %s6 = scalar_select 0, %s5, %s3
  $region1: #{tpu_custom_call.1} parent=0
    #allocation3 [shape = 'u8[16384]{0}', space=vmem, size = 0x4000, scoped, tag = 'input window, operand 0, single buffered']
    #allocation4 [shape = 's32[1]{0}', space=sflag, size = 0x4, scoped, tag = 'scoped memory for tpu_custom_call.1']
    #allocation5 [shape = 's32[1]{0}', space=sflag, size = 0x4, scoped, tag = 'scoped memory for tpu_custom_call.1']
    #allocation6 [shape = 'u8[262144]{0}', space=vmem, size = 0x40000, scoped, tag = 'input window, operand 1, single buffered']
    #allocation7 [shape = 's32[1]{0}', space=sflag, size = 0x4, scoped, tag = 'scoped memory for tpu_custom_call.1']
    #allocation8 [shape = 'u8[2048]{0}', space=vmem, size = 0x800, scoped, tag = 'output window, operand 0, single buffered']
    %7 = vsyncpa [#allocation4], 0
    %8 = vsyncpa [#allocation7], 0
    %9 = vsyncpa [#allocation5], 0
    // Predicated region
    $region2: #{tpu_custom_call.1} parent=1 // pred_check
      _
    $region3: #{tpu_custom_call.1} parent=1 // pred_check_branch
      %11 = sbr.rel (0) target = $region5
    $region4: #{tpu_custom_call.1} parent=1 // pred_region
      %13 = vsyncadd [#allocation4], 0
      %s15 = sshll.u32 %s0, 4
      %s16 = int_to_ptr.hbm [resolvable:$true] %s15
      %s17 = sshll.u32 [#allocation3], 4
      %s18 = int_to_ptr.vmem [resolvable:$true] %s17
      %20 = dma.hbm_to_vmem [thread:$0]  %s16, 512, %s18, [#allocation4]
    $region5: #{tpu_custom_call.1} parent=1 // pred_fallthru
      _
    // Predicated region
    $region6: #{tpu_custom_call.1} parent=1 // pred_check
      _
    $region7: #{tpu_custom_call.1} parent=1 // pred_check_branch
      %22 = sbr.rel (0) target = $region9
    $region8: #{tpu_custom_call.1} parent=1 // pred_region
      %24 = vsyncadd [#allocation7], 0
      %s25 = sshll.u32 %s1, 4
      %s26 = int_to_ptr.hbm [resolvable:$true] %s25
      %s27 = sshll.u32 [#allocation6], 4
      %s28 = int_to_ptr.vmem [resolvable:$true] %s27
      %33 = dma.hbm_to_vmem [thread:$0]  %s26, 8192, %s28, [#allocation7], 64, 64, 4
    $region9: #{tpu_custom_call.1} parent=1 // pred_fallthru
      _
    // Predicated region
    $region10: #{tpu_custom_call.1} parent=1 // pred_check
      _
    $region11: #{tpu_custom_call.1} parent=1 // pred_check_branch
      %35 = sbr.rel (0) target = $region13
    $region12: #{tpu_custom_call.1} parent=1 // pred_region
      %37 = dma.done [#allocation4], 512
    $region13: #{tpu_custom_call.1} parent=1 // pred_fallthru
      _
    // Predicated region
    $region14: #{tpu_custom_call.1} parent=1 // pred_check
      _
    $region15: #{tpu_custom_call.1} parent=1 // pred_check_branch
      %39 = sbr.rel (0) target = $region17
    $region16: #{tpu_custom_call.1} parent=1 // pred_region
      %41 = dma.done [#allocation7], 8192
    $region17: #{tpu_custom_call.1} parent=1 // pred_fallthru
      _
    %p42 = scmp.eq.s32.totalorder 0, 0
    // Predicated region
    $region18: #{tpu_custom_call.1} parent=1 // pred_check
      %p43 = pneg %p42
    $region19: #{tpu_custom_call.1} parent=1 // pred_check_branch
      %45 = sbr.rel (%p43) target = $region21
    $region20: #{tpu_custom_call.1} parent=1 // pred_region
      %46 = vst [vmem:[#allocation2] sm:$0xff] 0.0
    $region21: #{tpu_custom_call.1} parent=1 // pred_fallthru
      _
    %v47 = vld [vmem:[#allocation2] sm:$0xff]
    %v48 = vld [vmem:[#allocation3] sm:$0xff]
    %v49 = vld [vmem:[#allocation3 + $0x8] sm:$0xff]
    %v50 = vld [vmem:[#allocation3 + $0x10] sm:$0xff]
    %v51 = vld [vmem:[#allocation3 + $0x18] sm:$0xff]
    %v52 = vld [vmem:[#allocation6] sm:$0xf]
    %v53 = vld [vmem:[#allocation6 + $0x4] sm:$0xf]
    %v54 = vld [vmem:[#allocation6 + $0x8] sm:$0xf]
    %v55 = vld [vmem:[#allocation6 + $0xc] sm:$0xf]
    %v56 = vld [vmem:[#allocation6 + $0x10] sm:$0xf]
    %v57 = vld [vmem:[#allocation6 + $0x14] sm:$0xf]
    %v58 = vld [vmem:[#allocation6 + $0x18] sm:$0xf]
    %v59 = vld [vmem:[#allocation6 + $0x1c] sm:$0xf]
    %v60 = vld [vmem:[#allocation6 + $0x20] sm:$0xf]
    %v61 = vld [vmem:[#allocation6 + $0x24] sm:$0xf]
    %v62 = vld [vmem:[#allocation6 + $0x28] sm:$0xf]
    %v63 = vld [vmem:[#allocation6 + $0x2c] sm:$0xf]
    %v64 = vld [vmem:[#allocation6 + $0x30] sm:$0xf]
    %v65 = vld [vmem:[#allocation6 + $0x34] sm:$0xf]
    %v66 = vld [vmem:[#allocation6 + $0x38] sm:$0xf]
    %v67 = vld [vmem:[#allocation6 + $0x3c] sm:$0xf]
    %v68 = vld [vmem:[#allocation6 + $0x40] sm:$0xf]
    %v69 = vld [vmem:[#allocation6 + $0x44] sm:$0xf]
    %v70 = vld [vmem:[#allocation6 + $0x48] sm:$0xf]
    %v71 = vld [vmem:[#allocation6 + $0x4c] sm:$0xf]
    %v72 = vld [vmem:[#allocation6 + $0x50] sm:$0xf]
    %v73 = vld [vmem:[#allocation6 + $0x54] sm:$0xf]
    %v74 = vld [vmem:[#allocation6 + $0x58] sm:$0xf]
    %v75 = vld [vmem:[#allocation6 + $0x5c] sm:$0xf]
    %v76 = vld [vmem:[#allocation6 + $0x60] sm:$0xf]
    %v77 = vld [vmem:[#allocation6 + $0x64] sm:$0xf]
    %v78 = vld [vmem:[#allocation6 + $0x68] sm:$0xf]
    %v79 = vld [vmem:[#allocation6 + $0x6c] sm:$0xf]
    %v80 = vld [vmem:[#allocation6 + $0x70] sm:$0xf]
    %v81 = vld [vmem:[#allocation6 + $0x74] sm:$0xf]
    %v82 = vld [vmem:[#allocation6 + $0x78] sm:$0xf]
    %v83 = vld [vmem:[#allocation6 + $0x7c] sm:$0xf]
    %v84 = vld [vmem:[#allocation6 + $0x80] sm:$0xf]
    %v85 = vld [vmem:[#allocation6 + $0x84] sm:$0xf]
    %v86 = vld [vmem:[#allocation6 + $0x88] sm:$0xf]
    %v87 = vld [vmem:[#allocation6 + $0x8c] sm:$0xf]
    %v88 = vld [vmem:[#allocation6 + $0x90] sm:$0xf]
    %v89 = vld [vmem:[#allocation6 + $0x94] sm:$0xf]
    %v90 = vld [vmem:[#allocation6 + $0x98] sm:$0xf]
    %v91 = vld [vmem:[#allocation6 + $0x9c] sm:$0xf]
    %v92 = vld [vmem:[#allocation6 + $0xa0] sm:$0xf]
    %v93 = vld [vmem:[#allocation6 + $0xa4] sm:$0xf]
    %v94 = vld [vmem:[#allocation6 + $0xa8] sm:$0xf]
    %v95 = vld [vmem:[#allocation6 + $0xac] sm:$0xf]
    %v96 = vld [vmem:[#allocation6 + $0xb0] sm:$0xf]
    %v97 = vld [vmem:[#allocation6 + $0xb4] sm:$0xf]
    %v98 = vld [vmem:[#allocation6 + $0xb8] sm:$0xf]
    %v99 = vld [vmem:[#allocation6 + $0xbc] sm:$0xf]
    %v100 = vld [vmem:[#allocation6 + $0xc0] sm:$0xf]
    %v101 = vld [vmem:[#allocation6 + $0xc4] sm:$0xf]
    %v102 = vld [vmem:[#allocation6 + $0xc8] sm:$0xf]
    %v103 = vld [vmem:[#allocation6 + $0xcc] sm:$0xf]
    %v104 = vld [vmem:[#allocation6 + $0xd0] sm:$0xf]
    %v105 = vld [vmem:[#allocation6 + $0xd4] sm:$0xf]
    %v106 = vld [vmem:[#allocation6 + $0xd8] sm:$0xf]
    %v107 = vld [vmem:[#allocation6 + $0xdc] sm:$0xf]
    %v108 = vld [vmem:[#allocation6 + $0xe0] sm:$0xf]
    %v109 = vld [vmem:[#allocation6 + $0xe4] sm:$0xf]
    %v110 = vld [vmem:[#allocation6 + $0xe8] sm:$0xf]
    %v111 = vld [vmem:[#allocation6 + $0xec] sm:$0xf]
    %v112 = vld [vmem:[#allocation6 + $0xf0] sm:$0xf]
    %v113 = vld [vmem:[#allocation6 + $0xf4] sm:$0xf]
    %v114 = vld [vmem:[#allocation6 + $0xf8] sm:$0xf]
    %v115 = vld [vmem:[#allocation6 + $0xfc] sm:$0xf]
    %v116 = vld [vmem:[#allocation6 + $0x100] sm:$0xf]
    %v117 = vld [vmem:[#allocation6 + $0x104] sm:$0xf]
    %v118 = vld [vmem:[#allocation6 + $0x108] sm:$0xf]
    %v119 = vld [vmem:[#allocation6 + $0x10c] sm:$0xf]
    %v120 = vld [vmem:[#allocation6 + $0x110] sm:$0xf]
    %v121 = vld [vmem:[#allocation6 + $0x114] sm:$0xf]
    %v122 = vld [vmem:[#allocation6 + $0x118] sm:$0xf]
    %v123 = vld [vmem:[#allocation6 + $0x11c] sm:$0xf]
    %v124 = vld [vmem:[#allocation6 + $0x120] sm:$0xf]
    %v125 = vld [vmem:[#allocation6 + $0x124] sm:$0xf]
    %v126 = vld [vmem:[#allocation6 + $0x128] sm:$0xf]
    %v127 = vld [vmem:[#allocation6 + $0x12c] sm:$0xf]
    %v128 = vld [vmem:[#allocation6 + $0x130] sm:$0xf]
    %v129 = vld [vmem:[#allocation6 + $0x134] sm:$0xf]
    %v130 = vld [vmem:[#allocation6 + $0x138] sm:$0xf]
    %v131 = vld [vmem:[#allocation6 + $0x13c] sm:$0xf]
    %v132 = vld [vmem:[#allocation6 + $0x140] sm:$0xf]
    %v133 = vld [vmem:[#allocation6 + $0x144] sm:$0xf]
    %v134 = vld [vmem:[#allocation6 + $0x148] sm:$0xf]
    %v135 = vld [vmem:[#allocation6 + $0x14c] sm:$0xf]
    %v136 = vld [vmem:[#allocation6 + $0x150] sm:$0xf]
    %v137 = vld [vmem:[#allocation6 + $0x154] sm:$0xf]
    %v138 = vld [vmem:[#allocation6 + $0x158] sm:$0xf]
    %v139 = vld [vmem:[#allocation6 + $0x15c] sm:$0xf]
    %v140 = vld [vmem:[#allocation6 + $0x160] sm:$0xf]
    %v141 = vld [vmem:[#allocation6 + $0x164] sm:$0xf]
    %v142 = vld [vmem:[#allocation6 + $0x168] sm:$0xf]
    %v143 = vld [vmem:[#allocation6 + $0x16c] sm:$0xf]
    %v144 = vld [vmem:[#allocation6 + $0x170] sm:$0xf]
    %v145 = vld [vmem:[#allocation6 + $0x174] sm:$0xf]
    %v146 = vld [vmem:[#allocation6 + $0x178] sm:$0xf]
    %v147 = vld [vmem:[#allocation6 + $0x17c] sm:$0xf]
    %v148 = vld [vmem:[#allocation6 + $0x180] sm:$0xf]
    %v149 = vld [vmem:[#allocation6 + $0x184] sm:$0xf]
    %v150 = vld [vmem:[#allocation6 + $0x188] sm:$0xf]
    %v151 = vld [vmem:[#allocation6 + $0x18c] sm:$0xf]
    %v152 = vld [vmem:[#allocation6 + $0x190] sm:$0xf]
    %v153 = vld [vmem:[#allocation6 + $0x194] sm:$0xf]
    %v154 = vld [vmem:[#allocation6 + $0x198] sm:$0xf]
    %v155 = vld [vmem:[#allocation6 + $0x19c] sm:$0xf]
    %v156 = vld [vmem:[#allocation6 + $0x1a0] sm:$0xf]
    %v157 = vld [vmem:[#allocation6 + $0x1a4] sm:$0xf]
    %v158 = vld [vmem:[#allocation6 + $0x1a8] sm:$0xf]
    %v159 = vld [vmem:[#allocation6 + $0x1ac] sm:$0xf]
    %v160 = vld [vmem:[#allocation6 + $0x1b0] sm:$0xf]
    %v161 = vld [vmem:[#allocation6 + $0x1b4] sm:$0xf]
    %v162 = vld [vmem:[#allocation6 + $0x1b8] sm:$0xf]
    %v163 = vld [vmem:[#allocation6 + $0x1bc] sm:$0xf]
    %v164 = vld [vmem:[#allocation6 + $0x1c0] sm:$0xf]
    %v165 = vld [vmem:[#allocation6 + $0x1c4] sm:$0xf]
    %v166 = vld [vmem:[#allocation6 + $0x1c8] sm:$0xf]
    %v167 = vld [vmem:[#allocation6 + $0x1cc] sm:$0xf]
    %v168 = vld [vmem:[#allocation6 + $0x1d0] sm:$0xf]
    %v169 = vld [vmem:[#allocation6 + $0x1d4] sm:$0xf]
    %v170 = vld [vmem:[#allocation6 + $0x1d8] sm:$0xf]
    %v171 = vld [vmem:[#allocation6 + $0x1dc] sm:$0xf]
    %v172 = vld [vmem:[#allocation6 + $0x1e0] sm:$0xf]
    %v173 = vld [vmem:[#allocation6 + $0x1e4] sm:$0xf]
    %v174 = vld [vmem:[#allocation6 + $0x1e8] sm:$0xf]
    %v175 = vld [vmem:[#allocation6 + $0x1ec] sm:$0xf]
    %v176 = vld [vmem:[#allocation6 + $0x1f0] sm:$0xf]
    %v177 = vld [vmem:[#allocation6 + $0x1f4] sm:$0xf]
    %v178 = vld [vmem:[#allocation6 + $0x1f8] sm:$0xf]
    %v179 = vld [vmem:[#allocation6 + $0x1fc] sm:$0xf]
    %v184 = vunpack.c.l.b16 %v48
    %v185 = vunpack.c.h.b16 %v48
    %v186 = vunpack.c.l.b16 %v49
    %v187 = vunpack.c.h.b16 %v49
    %v188 = vunpack.c.l.b16 %v50
    %v189 = vunpack.c.h.b16 %v50
    %v190 = vunpack.c.l.b16 %v51
    %v191 = vunpack.c.h.b16 %v51
    %v192 = vpack.c.b16 %v184, %v184
    %v193 = vpack.c.b16 %v185, %v185
    %v194 = vpack.c.b16 %v186, %v186
    %v195 = vpack.c.b16 %v187, %v187
    %v196 = vpack.c.b16 %v188, %v188
    %v197 = vpack.c.b16 %v189, %v189
    %v198 = vpack.c.b16 %v190, %v190
    %v199 = vpack.c.b16 %v191, %v191
    %v336 = vunpack.c.l.b16 %v52
    %v337 = vunpack.c.l.b16 %v53
    %v338 = vunpack.c.l.b16 %v54
    %v339 = vunpack.c.l.b16 %v55
    %v340 = vunpack.c.l.b16 %v56
    %v341 = vunpack.c.l.b16 %v57
    %v342 = vunpack.c.l.b16 %v58
    %v343 = vunpack.c.l.b16 %v59
    %v344 = vunpack.c.l.b16 %v60
    %v345 = vunpack.c.l.b16 %v61
    %v346 = vunpack.c.l.b16 %v62
    %v347 = vunpack.c.l.b16 %v63
    %v348 = vunpack.c.l.b16 %v64
    %v349 = vunpack.c.l.b16 %v65
    %v350 = vunpack.c.l.b16 %v66
    %v351 = vunpack.c.l.b16 %v67
    %v352 = vunpack.c.l.b16 %v68
    %v353 = vunpack.c.l.b16 %v69
    %v354 = vunpack.c.l.b16 %v70
    %v355 = vunpack.c.l.b16 %v71
    %v356 = vunpack.c.l.b16 %v72
    %v357 = vunpack.c.l.b16 %v73
    %v358 = vunpack.c.l.b16 %v74
    %v359 = vunpack.c.l.b16 %v75
    %v360 = vunpack.c.l.b16 %v76
    %v361 = vunpack.c.l.b16 %v77
    %v362 = vunpack.c.l.b16 %v78
    %v363 = vunpack.c.l.b16 %v79
    %v364 = vunpack.c.l.b16 %v80
    %v365 = vunpack.c.l.b16 %v81
    %v366 = vunpack.c.l.b16 %v82
    %v367 = vunpack.c.l.b16 %v83
    %v368 = vunpack.c.l.b16 %v84
    %v369 = vunpack.c.l.b16 %v85
    %v370 = vunpack.c.l.b16 %v86
    %v371 = vunpack.c.l.b16 %v87
    %v372 = vunpack.c.l.b16 %v88
    %v373 = vunpack.c.l.b16 %v89
    %v374 = vunpack.c.l.b16 %v90
    %v375 = vunpack.c.l.b16 %v91
    %v376 = vunpack.c.l.b16 %v92
    %v377 = vunpack.c.l.b16 %v93
    %v378 = vunpack.c.l.b16 %v94
    %v379 = vunpack.c.l.b16 %v95
    %v380 = vunpack.c.l.b16 %v96
    %v381 = vunpack.c.l.b16 %v97
    %v382 = vunpack.c.l.b16 %v98
    %v383 = vunpack.c.l.b16 %v99
    %v384 = vunpack.c.l.b16 %v100
    %v385 = vunpack.c.l.b16 %v101
    %v386 = vunpack.c.l.b16 %v102
    %v387 = vunpack.c.l.b16 %v103
    %v388 = vunpack.c.l.b16 %v104
    %v389 = vunpack.c.l.b16 %v105
    %v390 = vunpack.c.l.b16 %v106
    %v391 = vunpack.c.l.b16 %v107
    %v392 = vunpack.c.l.b16 %v108
    %v393 = vunpack.c.l.b16 %v109
    %v394 = vunpack.c.l.b16 %v110
    %v395 = vunpack.c.l.b16 %v111
    %v396 = vunpack.c.l.b16 %v112
    %v397 = vunpack.c.l.b16 %v113
    %v398 = vunpack.c.l.b16 %v114
    %v399 = vunpack.c.l.b16 %v115
    %v400 = vunpack.c.l.b16 %v116
    %v401 = vunpack.c.l.b16 %v117
    %v402 = vunpack.c.l.b16 %v118
    %v403 = vunpack.c.l.b16 %v119
    %v404 = vunpack.c.l.b16 %v120
    %v405 = vunpack.c.l.b16 %v121
    %v406 = vunpack.c.l.b16 %v122
    %v407 = vunpack.c.l.b16 %v123
    %v408 = vunpack.c.l.b16 %v124
    %v409 = vunpack.c.l.b16 %v125
    %v410 = vunpack.c.l.b16 %v126
    %v411 = vunpack.c.l.b16 %v127
    %v412 = vunpack.c.l.b16 %v128
    %v413 = vunpack.c.l.b16 %v129
    %v414 = vunpack.c.l.b16 %v130
    %v415 = vunpack.c.l.b16 %v131
    %v416 = vunpack.c.l.b16 %v132
    %v417 = vunpack.c.l.b16 %v133
    %v418 = vunpack.c.l.b16 %v134
    %v419 = vunpack.c.l.b16 %v135
    %v420 = vunpack.c.l.b16 %v136
    %v421 = vunpack.c.l.b16 %v137
    %v422 = vunpack.c.l.b16 %v138
    %v423 = vunpack.c.l.b16 %v139
    %v424 = vunpack.c.l.b16 %v140
    %v425 = vunpack.c.l.b16 %v141
    %v426 = vunpack.c.l.b16 %v142
    %v427 = vunpack.c.l.b16 %v143
    %v428 = vunpack.c.l.b16 %v144
    %v429 = vunpack.c.l.b16 %v145
    %v430 = vunpack.c.l.b16 %v146
    %v431 = vunpack.c.l.b16 %v147
    %v432 = vunpack.c.l.b16 %v148
    %v433 = vunpack.c.l.b16 %v149
    %v434 = vunpack.c.l.b16 %v150
    %v435 = vunpack.c.l.b16 %v151
    %v436 = vunpack.c.l.b16 %v152
    %v437 = vunpack.c.l.b16 %v153
    %v438 = vunpack.c.l.b16 %v154
    %v439 = vunpack.c.l.b16 %v155
    %v440 = vunpack.c.l.b16 %v156
    %v441 = vunpack.c.l.b16 %v157
    %v442 = vunpack.c.l.b16 %v158
    %v443 = vunpack.c.l.b16 %v159
    %v444 = vunpack.c.l.b16 %v160
    %v445 = vunpack.c.l.b16 %v161
    %v446 = vunpack.c.l.b16 %v162
    %v447 = vunpack.c.l.b16 %v163
    %v448 = vunpack.c.l.b16 %v164
    %v449 = vunpack.c.l.b16 %v165
    %v450 = vunpack.c.l.b16 %v166
    %v451 = vunpack.c.l.b16 %v167
    %v452 = vunpack.c.l.b16 %v168
    %v453 = vunpack.c.l.b16 %v169
    %v454 = vunpack.c.l.b16 %v170
    %v455 = vunpack.c.l.b16 %v171
    %v456 = vunpack.c.l.b16 %v172
    %v457 = vunpack.c.l.b16 %v173
    %v458 = vunpack.c.l.b16 %v174
    %v459 = vunpack.c.l.b16 %v175
    %v460 = vunpack.c.l.b16 %v176
    %v461 = vunpack.c.l.b16 %v177
    %v462 = vunpack.c.l.b16 %v178
    %v463 = vunpack.c.l.b16 %v179
    %v464 = vpack.c.b16 %v337, %v336
    %v465 = vpack.c.b16 %v339, %v338
    %v466 = vpack.c.b16 %v341, %v340
    %v467 = vpack.c.b16 %v343, %v342
    %v468 = vpack.c.b16 %v345, %v344
    %v469 = vpack.c.b16 %v347, %v346
    %v470 = vpack.c.b16 %v349, %v348
    %v471 = vpack.c.b16 %v351, %v350
    %v472 = vpack.c.b16 %v353, %v352
    %v473 = vpack.c.b16 %v355, %v354
    %v474 = vpack.c.b16 %v357, %v356
    %v475 = vpack.c.b16 %v359, %v358
    %v476 = vpack.c.b16 %v361, %v360
    %v477 = vpack.c.b16 %v363, %v362
    %v478 = vpack.c.b16 %v365, %v364
    %v479 = vpack.c.b16 %v367, %v366
    %v480 = vpack.c.b16 %v369, %v368
    %v481 = vpack.c.b16 %v371, %v370
    %v482 = vpack.c.b16 %v373, %v372
    %v483 = vpack.c.b16 %v375, %v374
    %v484 = vpack.c.b16 %v377, %v376
    %v485 = vpack.c.b16 %v379, %v378
    %v486 = vpack.c.b16 %v381, %v380
    %v487 = vpack.c.b16 %v383, %v382
    %v488 = vpack.c.b16 %v385, %v384
    %v489 = vpack.c.b16 %v387, %v386
    %v490 = vpack.c.b16 %v389, %v388
    %v491 = vpack.c.b16 %v391, %v390
    %v492 = vpack.c.b16 %v393, %v392
    %v493 = vpack.c.b16 %v395, %v394
    %v494 = vpack.c.b16 %v397, %v396
    %v495 = vpack.c.b16 %v399, %v398
    %v496 = vpack.c.b16 %v401, %v400
    %v497 = vpack.c.b16 %v403, %v402
    %v498 = vpack.c.b16 %v405, %v404
    %v499 = vpack.c.b16 %v407, %v406
    %v500 = vpack.c.b16 %v409, %v408
    %v501 = vpack.c.b16 %v411, %v410
    %v502 = vpack.c.b16 %v413, %v412
    %v503 = vpack.c.b16 %v415, %v414
    %v504 = vpack.c.b16 %v417, %v416
    %v505 = vpack.c.b16 %v419, %v418
    %v506 = vpack.c.b16 %v421, %v420
    %v507 = vpack.c.b16 %v423, %v422
    %v508 = vpack.c.b16 %v425, %v424
    %v509 = vpack.c.b16 %v427, %v426
    %v510 = vpack.c.b16 %v429, %v428
    %v511 = vpack.c.b16 %v431, %v430
    %v512 = vpack.c.b16 %v433, %v432
    %v513 = vpack.c.b16 %v435, %v434
    %v514 = vpack.c.b16 %v437, %v436
    %v515 = vpack.c.b16 %v439, %v438
    %v516 = vpack.c.b16 %v441, %v440
    %v517 = vpack.c.b16 %v443, %v442
    %v518 = vpack.c.b16 %v445, %v444
    %v519 = vpack.c.b16 %v447, %v446
    %v520 = vpack.c.b16 %v449, %v448
    %v521 = vpack.c.b16 %v451, %v450
    %v522 = vpack.c.b16 %v453, %v452
    %v523 = vpack.c.b16 %v455, %v454
    %v524 = vpack.c.b16 %v457, %v456
    %v525 = vpack.c.b16 %v459, %v458
    %v526 = vpack.c.b16 %v461, %v460
    %v527 = vpack.c.b16 %v463, %v462
    %592 = vmatpush.bf16.msra.mxu0 %v471
    %593 = vmatpush.bf16.msra.mxu0 %v470
    %594 = vmatpush.bf16.msra.mxu0 %v469
    %595 = vmatpush.bf16.msra.mxu0 %v468
    %596 = vmatpush.bf16.msra.mxu0 %v467
    %597 = vmatpush.bf16.msra.mxu0 %v466
    %598 = vmatpush.bf16.msra.mxu0 %v465
    %599 = vmatpush.bf16.msra.mxu0 %v464
    %600 = vmatmul.bf16.gmra.mxu0 %v192
    %v601 = vpop.f32.mrf.mxu0
    %v602 = vadd.f32 0.0, %v601
    %v603 = vpop.f32.mrf.mxu0
    %604 = vdwg.mxu0
    %605 = vmatpush.bf16.msra.mxu0 %v479
    %606 = vmatpush.bf16.msra.mxu0 %v478
    %607 = vmatpush.bf16.msra.mxu0 %v477
    %608 = vmatpush.bf16.msra.mxu0 %v476
    %609 = vmatpush.bf16.msra.mxu0 %v475
    %610 = vmatpush.bf16.msra.mxu0 %v474
    %611 = vmatpush.bf16.msra.mxu0 %v473
    %612 = vmatpush.bf16.msra.mxu0 %v472
    %613 = vmatmul.bf16.gmra.mxu0 %v193
    %v614 = vpop.f32.mrf.mxu0
    %v615 = vadd.f32 %v602, %v614
    %v616 = vpop.f32.mrf.mxu0
    %617 = vdwg.mxu0
    %618 = vmatpush.bf16.msra.mxu0 %v487
    %619 = vmatpush.bf16.msra.mxu0 %v486
    %620 = vmatpush.bf16.msra.mxu0 %v485
    %621 = vmatpush.bf16.msra.mxu0 %v484
    %622 = vmatpush.bf16.msra.mxu0 %v483
    %623 = vmatpush.bf16.msra.mxu0 %v482
    %624 = vmatpush.bf16.msra.mxu0 %v481
    %625 = vmatpush.bf16.msra.mxu0 %v480
    %626 = vmatmul.bf16.gmra.mxu0 %v194
    %v627 = vpop.f32.mrf.mxu0
    %v628 = vadd.f32 %v615, %v627
    %v629 = vpop.f32.mrf.mxu0
    %630 = vdwg.mxu0
    %631 = vmatpush.bf16.msra.mxu0 %v495
    %632 = vmatpush.bf16.msra.mxu0 %v494
    %633 = vmatpush.bf16.msra.mxu0 %v493
    %634 = vmatpush.bf16.msra.mxu0 %v492
    %635 = vmatpush.bf16.msra.mxu0 %v491
    %636 = vmatpush.bf16.msra.mxu0 %v490
    %637 = vmatpush.bf16.msra.mxu0 %v489
    %638 = vmatpush.bf16.msra.mxu0 %v488
    %639 = vmatmul.bf16.gmra.mxu0 %v195
    %v640 = vpop.f32.mrf.mxu0
    %v641 = vadd.f32 %v628, %v640
    %v642 = vpop.f32.mrf.mxu0
    %643 = vdwg.mxu0
    %644 = vmatpush.bf16.msra.mxu0 %v503
    %645 = vmatpush.bf16.msra.mxu0 %v502
    %646 = vmatpush.bf16.msra.mxu0 %v501
    %647 = vmatpush.bf16.msra.mxu0 %v500
    %648 = vmatpush.bf16.msra.mxu0 %v499
    %649 = vmatpush.bf16.msra.mxu0 %v498
    %650 = vmatpush.bf16.msra.mxu0 %v497
    %651 = vmatpush.bf16.msra.mxu0 %v496
    %652 = vmatmul.bf16.gmra.mxu0 %v196
    %v653 = vpop.f32.mrf.mxu0
    %v654 = vadd.f32 %v641, %v653
    %v655 = vpop.f32.mrf.mxu0
    %656 = vdwg.mxu0
    %657 = vmatpush.bf16.msra.mxu0 %v511
    %658 = vmatpush.bf16.msra.mxu0 %v510
    %659 = vmatpush.bf16.msra.mxu0 %v509
    %660 = vmatpush.bf16.msra.mxu0 %v508
    %661 = vmatpush.bf16.msra.mxu0 %v507
    %662 = vmatpush.bf16.msra.mxu0 %v506
    %663 = vmatpush.bf16.msra.mxu0 %v505
    %664 = vmatpush.bf16.msra.mxu0 %v504
    %665 = vmatmul.bf16.gmra.mxu0 %v197
    %v666 = vpop.f32.mrf.mxu0
    %v667 = vadd.f32 %v654, %v666
    %v668 = vpop.f32.mrf.mxu0
    %669 = vdwg.mxu0
    %670 = vmatpush.bf16.msra.mxu0 %v519
    %671 = vmatpush.bf16.msra.mxu0 %v518
    %672 = vmatpush.bf16.msra.mxu0 %v517
    %673 = vmatpush.bf16.msra.mxu0 %v516
    %674 = vmatpush.bf16.msra.mxu0 %v515
    %675 = vmatpush.bf16.msra.mxu0 %v514
    %676 = vmatpush.bf16.msra.mxu0 %v513
    %677 = vmatpush.bf16.msra.mxu0 %v512
    %678 = vmatmul.bf16.gmra.mxu0 %v198
    %v679 = vpop.f32.mrf.mxu0
    %v680 = vadd.f32 %v667, %v679
    %v681 = vpop.f32.mrf.mxu0
    %682 = vdwg.mxu0
    %683 = vmatpush.bf16.msra.mxu0 %v527
    %684 = vmatpush.bf16.msra.mxu0 %v526
    %685 = vmatpush.bf16.msra.mxu0 %v525
    %686 = vmatpush.bf16.msra.mxu0 %v524
    %687 = vmatpush.bf16.msra.mxu0 %v523
    %688 = vmatpush.bf16.msra.mxu0 %v522
    %689 = vmatpush.bf16.msra.mxu0 %v521
    %690 = vmatpush.bf16.msra.mxu0 %v520
    %691 = vmatmul.bf16.gmra.mxu0 %v199
    %v692 = vpop.f32.mrf.mxu0
    %v693 = vadd.f32 %v680, %v692
    %v694 = vpop.f32.mrf.mxu0
    %695 = vdwg.mxu0
    %v696 = vadd.f32 %v47, %v693
    %697 = vst [vmem:[#allocation2] sm:$0xff] %v696
    // Predicated region
    $region22: #{tpu_custom_call.1} parent=1 // pred_check
      %p698 = pneg %p42
    $region23: #{tpu_custom_call.1} parent=1 // pred_check_branch
      %700 = sbr.rel (%p698) target = $region25
    $region24: #{tpu_custom_call.1} parent=1 // pred_region
      %v701 = vld [vmem:[#allocation2] sm:$0xff]
      %v702 = vmul.f32 %v701, %v701
      %703 = vadd.xlane.f32.xlu0 %v702
      %v704 = vpop.xlane.xlu0 %703
      %v705 = vmax.f32 %v704, 1e-24
      %v706 = vrsqrt.pop %v705
      %v707 = vmul.f32 %v706, %v705
      %v708 = vmul.f32 %v707, %v706
      %v709 = vmul.f32 0.5, %v708
      %v710 = vsub.f32 1.5, %v709
      %v711 = vmul.f32 %v706, %v710
      %vm712 = vweird.f32 %v705
      %vm713 = vweird.f32 %v706
      %vm714 = vmor %vm712, %vm713
      %v715 = vsel %vm714, %v706, %v711
      %v716 = vmul.f32 %v701, %v715
      %v717 = vpack.c.bf16 %v716, %v716
      %718 = vst [vmem:[#allocation8] sm:$0xf] %v717
    $region25: #{tpu_custom_call.1} parent=1 // pred_fallthru
      _
    // Predicated region
    $region26: #{tpu_custom_call.1} parent=1 // pred_check
      _
    $region27: #{tpu_custom_call.1} parent=1 // pred_check_branch
      %720 = sbr.rel (0) target = $region29
    $region28: #{tpu_custom_call.1} parent=1 // pred_region
      %722 = vsyncadd [#allocation5], 0
      %s724 = sshll.u32 [#allocation8], 4
      %s725 = int_to_ptr.vmem [resolvable:$true] %s724
      %s726 = sshll.u32 %s2, 4
      %s727 = int_to_ptr.hbm [resolvable:$true] %s726
      %729 = dma.vmem_to_hbm [thread:$0]  %s725, 64, %s727, [#allocation5]
    $region29: #{tpu_custom_call.1} parent=1 // pred_fallthru
      _
    // Predicated region
    $region30: #{tpu_custom_call.1} parent=1 // pred_check
      _
    $region31: #{tpu_custom_call.1} parent=1 // pred_check_branch
      %731 = sbr.rel (0) target = $region33
    $region32: #{tpu_custom_call.1} parent=1 // pred_region
      %733 = dma.done [#allocation5], 64
    $region33: #{tpu_custom_call.1} parent=1 // pred_fallthru
      _
    %734 = vsyncpa [#allocation4], 1
    %735 = vsyncpa [#allocation7], 1
    %736 = vsyncpa [#allocation5], 1

</llo_original>
